<compile_context>
chip_gen: v7x
topology: tpu7x:2x2x1
jax: 0.10.0
libtpu: 0.0.40
codegen_flags: <defaults>
</compile_context>

<pallas_src>
import functools

import jax
import jax.numpy as jnp
from jax import lax
from jax.experimental import pallas as pl
from jax.experimental.pallas import tpu as pltpu

_LANE = 128      # vreg lane width
_SUB = 8         # vreg sublane count / row sub-block size
_FILL = -1e30    # "minus infinity" pad value (finite: avoids inf/nan math)


def _round_up(x, m):
    return ((x + m - 1) // m) * m


def _sparsemax_pairwise_kernel(x_ref, o_ref):
    """Sort-free sparsemax via the O(D^2) pairwise-relu characterization."""
    rows, dp = x_ref.shape
    n_sub = rows // _SUB
    n_itiles = dp // _LANE
    n_jgroups = dp // _SUB

    def row_block(r, carry):
        r0 = pl.multiple_of(r * _SUB, _SUB)
        z = x_ref[pl.ds(r0, _SUB), :].astype(jnp.float32)   # (8, Dp) rows->sublanes, feat->lanes
        # One hoisted relayout per sub-block: the j axis of the pairwise
        # interaction moves onto sublanes (lane dim of size 1 broadcasts).
        zj = z[:, :, None]                                   # (8, Dp, 1)

        rho = jnp.zeros((_SUB, 1), jnp.float32)
        sum_s = jnp.zeros((_SUB, 1), jnp.float32)
        for t in range(n_itiles):                            # static: i tiled to 128 lanes
            zi = z[:, t * _LANE:(t + 1) * _LANE]             # (8, 128) static lane slice
            zi_b = jnp.broadcast_to(zi[:, None, :], (_SUB, _SUB, _LANE))  # hoisted bcast
            # acc[m, s, i] accumulates relu(z_j - z_i) for j in sublane slot s;
            # 8 vregs, register resident, pure-VPU updates.
            acc = jnp.zeros((_SUB, _SUB, _LANE), jnp.float32)
            for g in range(n_jgroups):                       # static: 8 j's per step
                zjg = zj[:, g * _SUB:(g + 1) * _SUB, :]      # (8, 8, 1) static sublane slice
                acc = acc + jnp.maximum(zjg - zi_b, 0.0)     # sub + max + add
            relu_sum = jnp.sum(acc, axis=1)                  # (8, 128): one sublane collapse
            m = (relu_sum < 1.0).astype(jnp.float32)         # support mask (single f32 mask)
            rho = rho + jnp.sum(m, axis=-1, keepdims=True)
            sum_s = sum_s + jnp.sum(m * zi, axis=-1, keepdims=True)

        rho = jnp.maximum(rho, 1.0)        # guard all-_FILL padding rows
        tau = (sum_s - 1.0) / rho          # exact f32 divide
        o_ref[pl.ds(r0, _SUB), :] = jnp.maximum(z - tau, 0.0).astype(o_ref.dtype)
        return carry

    lax.fori_loop(0, n_sub, row_block, 0)


def _sparsemax_bisect_kernel(x_ref, o_ref, *, n_iters):
    """Sparsemax via fixed-iteration bisection on tau (O(n_iters * D) work).

    tau* is the unique root of f(t) = sum_i relu(z_i - t) - 1 on
    [max(z) - 1, max(z)]; after localizing it to ~2^-n_iters we recover the
    support and recompute tau exactly from the support sum, so accuracy
    matches the sort-based reference.
    """
    rows, dp = x_ref.shape
    n_sub = rows // _SUB

    def row_block(r, carry):
        r0 = pl.multiple_of(r * _SUB, _SUB)
        z = x_ref[pl.ds(r0, _SUB), :].astype(jnp.float32)    # (8, Dp)
        z_max = jnp.max(z, axis=-1, keepdims=True)           # (8, 1)

        def bisect(_, lh):
            lo, hi = lh
            mid = 0.5 * (lo + hi)
            f = jnp.sum(jnp.maximum(z - mid, 0.0), axis=-1, keepdims=True)
            gt = f > 1.0                                     # tau* is above mid
            return jnp.where(gt, mid, lo), jnp.where(gt, hi, mid)

        lo, hi = lax.fori_loop(0, n_iters, bisect, (z_max - 1.0, z_max))
        tau0 = 0.5 * (lo + hi)

        m = (z > tau0).astype(jnp.float32)                   # support mask
        rho = jnp.maximum(jnp.sum(m, axis=-1, keepdims=True), 1.0)
        sum_s = jnp.sum(m * z, axis=-1, keepdims=True)
        tau = (sum_s - 1.0) / rho                            # exact refinement
        o_ref[pl.ds(r0, _SUB), :] = jnp.maximum(z - tau, 0.0).astype(o_ref.dtype)
        return carry

    lax.fori_loop(0, n_sub, row_block, 0)


def sparsemax(x, *, block_rows=None, bisect_threshold=512, bisect_iters=30):
    """Row-wise sparsemax over dim=1 of a 2-D (batch, features) array."""
    N, D = x.shape
    orig_dtype = x.dtype

    # Lane-dense feature padding: every load/store is an unmasked full-lane
    # access; padded columns use _FILL, never enter the support, and emit 0.
    Dp = max(_LANE, _round_up(D, _LANE))
    use_bisect = Dp >= bisect_threshold

    N8 = _round_up(max(N, 1), _SUB)

    if block_rows is None:
        # In+out tiles, double-buffered (4 f32 copies of (block_rows, Dp)),
        # kept under ~8 MiB; big blocks amortize the ~0.35 us/step grid cost.
        cap = (8 * 1024 * 1024) // (16 * Dp)
        block_rows = min(1024, max(_SUB, (cap // _SUB) * _SUB))
    block_rows = max(_SUB, (int(block_rows) // _SUB) * _SUB)
    if N8 >= 2 * _SUB:
        # >= 2 grid steps whenever possible so both v7x TensorCores get work.
        block_rows = min(block_rows, _round_up(pl.cdiv(N8, 2), _SUB))
    block_rows = min(block_rows, N8)
    Np = _round_up(N8, block_rows)

    xp = x
    if (Np, Dp) != (N, D):
        xp = jnp.pad(x, ((0, Np - N), (0, Dp - D)), constant_values=_FILL)

    if use_bisect:
        kernel = functools.partial(_sparsemax_bisect_kernel, n_iters=bisect_iters)
        flops = Np * Dp * (3 * bisect_iters + 8)
    else:
        kernel = _sparsemax_pairwise_kernel
        flops = 3 * Np * Dp * Dp + 8 * Np * Dp
    bytes_accessed = Np * Dp * 2 * jnp.dtype(orig_dtype).itemsize

    out = pl.pallas_call(
        kernel,
        out_shape=jax.ShapeDtypeStruct((Np, Dp), orig_dtype),
        grid_spec=pltpu.PrefetchScalarGridSpec(
            num_scalar_prefetch=0,
            grid=(Np // block_rows,),
            in_specs=[pl.BlockSpec((block_rows, Dp), lambda i: (i, 0))],
            out_specs=pl.BlockSpec((block_rows, Dp), lambda i: (i, 0)),
        ),
        compiler_params=pltpu.CompilerParams(
            dimension_semantics=("parallel",),      # rows are independent
            vmem_limit_bytes=24 * 1024 * 1024,      # safe on v7x's 64 MiB VMEM
        ),
        cost_estimate=pl.CostEstimate(
            flops=int(flops), transcendentals=0,
            bytes_accessed=int(bytes_accessed)),
    )(xp)

    if (Np, Dp) != (N, D):
        out = out[:N, :D]
    return out


def sparsemax_ref(x):
    """Pure-JAX transliteration of the PyTorch forward (sort-based)."""
    sorted_x = -jnp.sort(-x, axis=1)                       # descending
    cum_sums = jnp.cumsum(sorted_x, axis=1)
    k = jnp.arange(1, x.shape[1] + 1, dtype=x.dtype)[None, :]
    thr = (cum_sums - 1.0) / k
    rho = jnp.sum(sorted_x > thr, axis=1)
    threshold = thr[jnp.arange(x.shape[0]), jnp.clip(rho - 1, 0)]
    return jnp.maximum(x - threshold[:, None], jnp.zeros_like(x))


if __name__ == "__main__":
    key = jax.random.PRNGKey(0)
    k0, k1, k2 = jax.random.split(key, 3)

    # Module-scale shape (batch of logits, reduction over dim=1).
    x = jax.random.normal(k0, (8, 32), dtype=jnp.float32)
    out = jax.block_until_ready(sparsemax(x))
    ref = sparsemax_ref(x)
    assert out.shape == x.shape and out.dtype == x.dtype
    assert jnp.allclose(out, ref, atol=1e-5, rtol=1e-5), "mismatch vs reference"
    assert jnp.allclose(jnp.sum(out, axis=1), 1.0, atol=1e-5)

    # Lane padding (300 -> 384), multi-group j loop, and a 2-step row grid
    # (24 rows -> 2 blocks of 16, exercising the v7x two-TensorCore split).
    x2 = jax.random.normal(k1, (24, 300), dtype=jnp.float32) * 3.0
    out2 = jax.block_until_ready(sparsemax(x2))
    ref2 = sparsemax_ref(x2)
    assert jnp.allclose(out2, ref2, atol=1e-5, rtol=1e-5), "mismatch (padded/chunked)"
    assert jnp.allclose(jnp.sum(out2, axis=1), 1.0, atol=1e-5)

    # Large-D path: fixed-iteration tau bisection instead of O(D^2) pairwise.
    x3 = jax.random.normal(k2, (16, 1024), dtype=jnp.float32) * 2.0
    out3 = jax.block_until_ready(sparsemax(x3))
    ref3 = sparsemax_ref(x3)
    assert jnp.allclose(out3, ref3, atol=1e-5, rtol=1e-5), "mismatch (bisection path)"
    assert jnp.allclose(jnp.sum(out3, axis=1), 1.0, atol=1e-5)

    print("KERNEL_OK")
</pallas_src>

<mosaic_0001>
module attributes {stable_mosaic.version = 11 : i64} {
  func.func @_sparsemax_pairwise_kernel(%arg0: i32, %arg1: memref<8x128xf32, #tpu.memory_space<vmem>>, %arg2: memref<8x128xf32, #tpu.memory_space<vmem>>) attributes {dimension_semantics = [#tpu.dimension_semantics<parallel>], iteration_bounds = array<i64: 1>, scalar_prefetch = 0 : i64, scratch_operands = 0 : i64, tpu.core_type = #tpu.core_type<tc>, window_params = [{transform_indices = @transform_0, window_bounds = array<i64: 8, 128>}, {transform_indices = @transform_1, window_bounds = array<i64: 8, 128>}]} {
    %c0_i32 = arith.constant 0 : i32
    %c8_i32 = arith.constant 8 : i32
    %0 = arith.muli %c0_i32, %c8_i32 : i32
    %1 = tpu.assume_multiple %0, 8 : i32
    %2 = arith.index_cast %1 : i32 to index
    %c0 = arith.constant 0 : index
    %3 = vector.load %arg1[%2, %c0] : memref<8x128xf32, #tpu.memory_space<vmem>>, vector<8x128xf32>
    %4 = vector.shape_cast %3 : vector<8x128xf32> to vector<8x128x1xf32>
    %cst = arith.constant 0.000000e+00 : f32
    %5 = vector.broadcast %cst : f32 to vector<8x1xf32>
    %cst_0 = arith.constant 0.000000e+00 : f32
    %6 = vector.broadcast %cst_0 : f32 to vector<8x1xf32>
    %7 = vector.shape_cast %3 : vector<8x128xf32> to vector<8x1x128xf32>
    %8 = vector.shape_cast %7 : vector<8x1x128xf32> to vector<8x1x128xf32>
    %9 = vector.broadcast %8 : vector<8x1x128xf32> to vector<8x8x128xf32>
    %cst_1 = arith.constant 0.000000e+00 : f32
    %10 = vector.broadcast %cst_1 : f32 to vector<8x8x128xf32>
    %11 = vector.extract_strided_slice %4 {offsets = [0, 0, 0], sizes = [8, 8, 1], strides = [1, 1, 1]} : vector<8x128x1xf32> to vector<8x8x1xf32>
    %12 = vector.broadcast %11 : vector<8x8x1xf32> to vector<8x8x128xf32>
    %13 = arith.subf %12, %9 : vector<8x8x128xf32>
    %cst_2 = arith.constant 0.000000e+00 : f32
    %14 = vector.broadcast %cst_2 : f32 to vector<8x8x128xf32>
    %15 = arith.maximumf %13, %14 : vector<8x8x128xf32>
    %16 = arith.addf %10, %15 : vector<8x8x128xf32>
    %17 = vector.extract_strided_slice %4 {offsets = [0, 8, 0], sizes = [8, 8, 1], strides = [1, 1, 1]} : vector<8x128x1xf32> to vector<8x8x1xf32>
    %18 = vector.broadcast %17 : vector<8x8x1xf32> to vector<8x8x128xf32>
    %19 = arith.subf %18, %9 : vector<8x8x128xf32>
    %cst_3 = arith.constant 0.000000e+00 : f32
    %20 = vector.broadcast %cst_3 : f32 to vector<8x8x128xf32>
    %21 = arith.maximumf %19, %20 : vector<8x8x128xf32>
    %22 = arith.addf %16, %21 : vector<8x8x128xf32>
    %23 = vector.extract_strided_slice %4 {offsets = [0, 16, 0], sizes = [8, 8, 1], strides = [1, 1, 1]} : vector<8x128x1xf32> to vector<8x8x1xf32>
    %24 = vector.broadcast %23 : vector<8x8x1xf32> to vector<8x8x128xf32>
    %25 = arith.subf %24, %9 : vector<8x8x128xf32>
    %cst_4 = arith.constant 0.000000e+00 : f32
    %26 = vector.broadcast %cst_4 : f32 to vector<8x8x128xf32>
    %27 = arith.maximumf %25, %26 : vector<8x8x128xf32>
    %28 = arith.addf %22, %27 : vector<8x8x128xf32>
    %29 = vector.extract_strided_slice %4 {offsets = [0, 24, 0], sizes = [8, 8, 1], strides = [1, 1, 1]} : vector<8x128x1xf32> to vector<8x8x1xf32>
    %30 = vector.broadcast %29 : vector<8x8x1xf32> to vector<8x8x128xf32>
    %31 = arith.subf %30, %9 : vector<8x8x128xf32>
    %cst_5 = arith.constant 0.000000e+00 : f32
    %32 = vector.broadcast %cst_5 : f32 to vector<8x8x128xf32>
    %33 = arith.maximumf %31, %32 : vector<8x8x128xf32>
    %34 = arith.addf %28, %33 : vector<8x8x128xf32>
    %35 = vector.extract_strided_slice %4 {offsets = [0, 32, 0], sizes = [8, 8, 1], strides = [1, 1, 1]} : vector<8x128x1xf32> to vector<8x8x1xf32>
    %36 = vector.broadcast %35 : vector<8x8x1xf32> to vector<8x8x128xf32>
    %37 = arith.subf %36, %9 : vector<8x8x128xf32>
    %cst_6 = arith.constant 0.000000e+00 : f32
    %38 = vector.broadcast %cst_6 : f32 to vector<8x8x128xf32>
    %39 = arith.maximumf %37, %38 : vector<8x8x128xf32>
    %40 = arith.addf %34, %39 : vector<8x8x128xf32>
    %41 = vector.extract_strided_slice %4 {offsets = [0, 40, 0], sizes = [8, 8, 1], strides = [1, 1, 1]} : vector<8x128x1xf32> to vector<8x8x1xf32>
    %42 = vector.broadcast %41 : vector<8x8x1xf32> to vector<8x8x128xf32>
    %43 = arith.subf %42, %9 : vector<8x8x128xf32>
    %cst_7 = arith.constant 0.000000e+00 : f32
    %44 = vector.broadcast %cst_7 : f32 to vector<8x8x128xf32>
    %45 = arith.maximumf %43, %44 : vector<8x8x128xf32>
    %46 = arith.addf %40, %45 : vector<8x8x128xf32>
    %47 = vector.extract_strided_slice %4 {offsets = [0, 48, 0], sizes = [8, 8, 1], strides = [1, 1, 1]} : vector<8x128x1xf32> to vector<8x8x1xf32>
    %48 = vector.broadcast %47 : vector<8x8x1xf32> to vector<8x8x128xf32>
    %49 = arith.subf %48, %9 : vector<8x8x128xf32>
    %cst_8 = arith.constant 0.000000e+00 : f32
    %50 = vector.broadcast %cst_8 : f32 to vector<8x8x128xf32>
    %51 = arith.maximumf %49, %50 : vector<8x8x128xf32>
    %52 = arith.addf %46, %51 : vector<8x8x128xf32>
    %53 = vector.extract_strided_slice %4 {offsets = [0, 56, 0], sizes = [8, 8, 1], strides = [1, 1, 1]} : vector<8x128x1xf32> to vector<8x8x1xf32>
    %54 = vector.broadcast %53 : vector<8x8x1xf32> to vector<8x8x128xf32>
    %55 = arith.subf %54, %9 : vector<8x8x128xf32>
    %cst_9 = arith.constant 0.000000e+00 : f32
    %56 = vector.broadcast %cst_9 : f32 to vector<8x8x128xf32>
    %57 = arith.maximumf %55, %56 : vector<8x8x128xf32>
    %58 = arith.addf %52, %57 : vector<8x8x128xf32>
    %59 = vector.extract_strided_slice %4 {offsets = [0, 64, 0], sizes = [8, 8, 1], strides = [1, 1, 1]} : vector<8x128x1xf32> to vector<8x8x1xf32>
    %60 = vector.broadcast %59 : vector<8x8x1xf32> to vector<8x8x128xf32>
    %61 = arith.subf %60, %9 : vector<8x8x128xf32>
    %cst_10 = arith.constant 0.000000e+00 : f32
    %62 = vector.broadcast %cst_10 : f32 to vector<8x8x128xf32>
    %63 = arith.maximumf %61, %62 : vector<8x8x128xf32>
    %64 = arith.addf %58, %63 : vector<8x8x128xf32>
    %65 = vector.extract_strided_slice %4 {offsets = [0, 72, 0], sizes = [8, 8, 1], strides = [1, 1, 1]} : vector<8x128x1xf32> to vector<8x8x1xf32>
    %66 = vector.broadcast %65 : vector<8x8x1xf32> to vector<8x8x128xf32>
    %67 = arith.subf %66, %9 : vector<8x8x128xf32>
    %cst_11 = arith.constant 0.000000e+00 : f32
    %68 = vector.broadcast %cst_11 : f32 to vector<8x8x128xf32>
    %69 = arith.maximumf %67, %68 : vector<8x8x128xf32>
    %70 = arith.addf %64, %69 : vector<8x8x128xf32>
    %71 = vector.extract_strided_slice %4 {offsets = [0, 80, 0], sizes = [8, 8, 1], strides = [1, 1, 1]} : vector<8x128x1xf32> to vector<8x8x1xf32>
    %72 = vector.broadcast %71 : vector<8x8x1xf32> to vector<8x8x128xf32>
    %73 = arith.subf %72, %9 : vector<8x8x128xf32>
    %cst_12 = arith.constant 0.000000e+00 : f32
    %74 = vector.broadcast %cst_12 : f32 to vector<8x8x128xf32>
    %75 = arith.maximumf %73, %74 : vector<8x8x128xf32>
    %76 = arith.addf %70, %75 : vector<8x8x128xf32>
    %77 = vector.extract_strided_slice %4 {offsets = [0, 88, 0], sizes = [8, 8, 1], strides = [1, 1, 1]} : vector<8x128x1xf32> to vector<8x8x1xf32>
    %78 = vector.broadcast %77 : vector<8x8x1xf32> to vector<8x8x128xf32>
    %79 = arith.subf %78, %9 : vector<8x8x128xf32>
    %cst_13 = arith.constant 0.000000e+00 : f32
    %80 = vector.broadcast %cst_13 : f32 to vector<8x8x128xf32>
    %81 = arith.maximumf %79, %80 : vector<8x8x128xf32>
    %82 = arith.addf %76, %81 : vector<8x8x128xf32>
    %83 = vector.extract_strided_slice %4 {offsets = [0, 96, 0], sizes = [8, 8, 1], strides = [1, 1, 1]} : vector<8x128x1xf32> to vector<8x8x1xf32>
    %84 = vector.broadcast %83 : vector<8x8x1xf32> to vector<8x8x128xf32>
    %85 = arith.subf %84, %9 : vector<8x8x128xf32>
    %cst_14 = arith.constant 0.000000e+00 : f32
    %86 = vector.broadcast %cst_14 : f32 to vector<8x8x128xf32>
    %87 = arith.maximumf %85, %86 : vector<8x8x128xf32>
    %88 = arith.addf %82, %87 : vector<8x8x128xf32>
    %89 = vector.extract_strided_slice %4 {offsets = [0, 104, 0], sizes = [8, 8, 1], strides = [1, 1, 1]} : vector<8x128x1xf32> to vector<8x8x1xf32>
    %90 = vector.broadcast %89 : vector<8x8x1xf32> to vector<8x8x128xf32>
    %91 = arith.subf %90, %9 : vector<8x8x128xf32>
    %cst_15 = arith.constant 0.000000e+00 : f32
    %92 = vector.broadcast %cst_15 : f32 to vector<8x8x128xf32>
    %93 = arith.maximumf %91, %92 : vector<8x8x128xf32>
    %94 = arith.addf %88, %93 : vector<8x8x128xf32>
    %95 = vector.extract_strided_slice %4 {offsets = [0, 112, 0], sizes = [8, 8, 1], strides = [1, 1, 1]} : vector<8x128x1xf32> to vector<8x8x1xf32>
    %96 = vector.broadcast %95 : vector<8x8x1xf32> to vector<8x8x128xf32>
    %97 = arith.subf %96, %9 : vector<8x8x128xf32>
    %cst_16 = arith.constant 0.000000e+00 : f32
    %98 = vector.broadcast %cst_16 : f32 to vector<8x8x128xf32>
    %99 = arith.maximumf %97, %98 : vector<8x8x128xf32>
    %100 = arith.addf %94, %99 : vector<8x8x128xf32>
    %101 = vector.extract_strided_slice %4 {offsets = [0, 120, 0], sizes = [8, 8, 1], strides = [1, 1, 1]} : vector<8x128x1xf32> to vector<8x8x1xf32>
    %102 = vector.broadcast %101 : vector<8x8x1xf32> to vector<8x8x128xf32>
    %103 = arith.subf %102, %9 : vector<8x8x128xf32>
    %cst_17 = arith.constant 0.000000e+00 : f32
    %104 = vector.broadcast %cst_17 : f32 to vector<8x8x128xf32>
    %105 = arith.maximumf %103, %104 : vector<8x8x128xf32>
    %106 = arith.addf %100, %105 : vector<8x8x128xf32>
    %cst_18 = arith.constant dense<0.000000e+00> : vector<8x128xf32>
    %107 = vector.multi_reduction <add>, %106, %cst_18 [1] : vector<8x8x128xf32> to vector<8x128xf32>
    %cst_19 = arith.constant 1.000000e+00 : f32
    %108 = vector.broadcast %cst_19 : f32 to vector<8x128xf32>
    %109 = arith.cmpf olt, %107, %108 : vector<8x128xf32>
    %110 = arith.extui %109 : vector<8x128xi1> to vector<8x128xi32>
    %111 = arith.sitofp %110 : vector<8x128xi32> to vector<8x128xf32>
    %cst_20 = arith.constant dense<0.000000e+00> : vector<8xf32>
    %112 = vector.multi_reduction <add>, %111, %cst_20 [1] : vector<8x128xf32> to vector<8xf32>
    %113 = vector.shape_cast %112 : vector<8xf32> to vector<8x1xf32>
    %114 = arith.addf %5, %113 : vector<8x1xf32>
    %115 = arith.mulf %111, %3 : vector<8x128xf32>
    %cst_21 = arith.constant dense<0.000000e+00> : vector<8xf32>
    %116 = vector.multi_reduction <add>, %115, %cst_21 [1] : vector<8x128xf32> to vector<8xf32>
    %117 = vector.shape_cast %116 : vector<8xf32> to vector<8x1xf32>
    %118 = arith.addf %6, %117 : vector<8x1xf32>
    %cst_22 = arith.constant 1.000000e+00 : f32
    %119 = vector.broadcast %cst_22 : f32 to vector<8x1xf32>
    %120 = arith.maximumf %114, %119 : vector<8x1xf32>
    %cst_23 = arith.constant 1.000000e+00 : f32
    %121 = vector.broadcast %cst_23 : f32 to vector<8x1xf32>
    %122 = arith.subf %118, %121 : vector<8x1xf32>
    %123 = arith.divf %122, %120 : vector<8x1xf32>
    %124 = vector.broadcast %123 : vector<8x1xf32> to vector<8x128xf32>
    %125 = arith.subf %3, %124 : vector<8x128xf32>
    %cst_24 = arith.constant 0.000000e+00 : f32
    %126 = vector.broadcast %cst_24 : f32 to vector<8x128xf32>
    %127 = arith.maximumf %125, %126 : vector<8x128xf32>
    %128 = arith.index_cast %1 : i32 to index
    %c0_25 = arith.constant 0 : index
    %129 = vector.load %arg2[%128, %c0_25] : memref<8x128xf32, #tpu.memory_space<vmem>>, vector<8x128xf32>
    tpu.vector_store %arg2[%128, %c0_25], %127 {strides = array<i32>} : memref<8x128xf32, #tpu.memory_space<vmem>>, vector<8x128xf32>,
    %c1_i32 = arith.constant 1 : i32
    return
  }
  func.func @transform_0(%arg0: i32) -> (i32, i32) {
    %c0_i32 = arith.constant 0 : i32
    %c0_i32_0 = arith.constant 0 : i32
    return %arg0, %c0_i32 : i32, i32
  }
  func.func @transform_1(%arg0: i32) -> (i32, i32) {
    %c0_i32 = arith.constant 0 : i32
    %c0_i32_0 = arith.constant 0 : i32
    return %arg0, %c0_i32 : i32, i32
  }
}

</mosaic_0001>

<llo_original>
// kernel: tpu_custom_call.1
$region0: #{tpu_custom_call.1}
  #allocation0 [shape = 'u32[]', space=smem, size = 0x4, offset = 0x4, fixed_abs, tag = 'smem constant byte address 0x4 - core index']
  #allocation1 [shape = 'u32[144,128]{1,0:T(1,128)}', space=vmem, size = 0x12000, scoped, tag = 'internal scratch']
  %s0 = inlined_call_operand.hbm [shape: f32[8,128], index: 0, kind: input, shape index: {}]
  %s1 = inlined_call_operand.hbm [shape: f32[8,128], index: 1, kind: output, shape index: {}]
  %s2 = sld [smem:[#allocation0]]
  $region18: #{tpu_custom_call.1} parent=0
    _
  %s4 = ssub.s32 1, %s2
  %s5 = scalar_select 0, %s4, %s2
  $region1: #{tpu_custom_call.1} parent=0
    #allocation2 [shape = 'u8[4096]{0}', space=vmem, size = 0x1000, scoped, tag = 'input window, operand 0, single buffered']
    #allocation3 [shape = 's32[1]{0}', space=sflag, size = 0x4, scoped, tag = 'scoped memory for tpu_custom_call.1']
    #allocation4 [shape = 's32[1]{0}', space=sflag, size = 0x4, scoped, tag = 'scoped memory for tpu_custom_call.1']
    #allocation5 [shape = 'u8[4096]{0}', space=vmem, size = 0x1000, scoped, tag = 'output window, operand 0, single buffered']
    %6 = vsyncpa [#allocation3], 0
    %7 = vsyncpa [#allocation4], 0
    // Predicated region
    $region2: #{tpu_custom_call.1} parent=1 // pred_check
      _
    $region3: #{tpu_custom_call.1} parent=1 // pred_check_branch
      %9 = sbr.rel (0) target = $region5
    $region4: #{tpu_custom_call.1} parent=1 // pred_region
      %s11 = ssub.s32 128, 128
      %12 = vsyncadd [#allocation3], %s11
      %s14 = sshll.u32 [#allocation2], 4
      %s15 = int_to_ptr.vmem [resolvable:$true] %s14
      %17 = dma.hbm_to_vmem [thread:$0]  %s0, 128, %s15, [#allocation3]
    $region5: #{tpu_custom_call.1} parent=1 // pred_fallthru
      _
    // Predicated region
    $region6: #{tpu_custom_call.1} parent=1 // pred_check
      _
    $region7: #{tpu_custom_call.1} parent=1 // pred_check_branch
      %19 = sbr.rel (0) target = $region9
    $region8: #{tpu_custom_call.1} parent=1 // pred_region
      %20 = dma.done [#allocation3], 128
    $region9: #{tpu_custom_call.1} parent=1 // pred_fallthru
      _
    %v21 = vld [vmem:[#allocation2] sm:$0xff]
    %v22 = vlaneseq
    %v23 = vshrl.u32 %v22, 7
    %v24 = vsub.s32 0, %v23
    %v25 = vrot.slane %v21, %v24
    %27 = vbcast.lane.b32.xlu0 %v25, 256
    %v28 = vpop.permute.xlu0 %27
    %s30 = sor.u32 256, 8
    %31 = vbcast.lane.b32.xlu0 %v25, %s30
    %v32 = vpop.permute.xlu0 %31
    %s34 = sor.u32 256, 16
    %35 = vbcast.lane.b32.xlu0 %v25, %s34
    %v36 = vpop.permute.xlu0 %35
    %s38 = sor.u32 256, 24
    %39 = vbcast.lane.b32.xlu0 %v25, %s38
    %v40 = vpop.permute.xlu0 %39
    %s42 = sor.u32 256, 32
    %43 = vbcast.lane.b32.xlu0 %v25, %s42
    %v44 = vpop.permute.xlu0 %43
    %s46 = sor.u32 256, 40
    %47 = vbcast.lane.b32.xlu0 %v25, %s46
    %v48 = vpop.permute.xlu0 %47
    %s50 = sor.u32 256, 48
    %51 = vbcast.lane.b32.xlu0 %v25, %s50
    %v52 = vpop.permute.xlu0 %51
    %s54 = sor.u32 256, 56
    %55 = vbcast.lane.b32.xlu0 %v25, %s54
    %v56 = vpop.permute.xlu0 %55
    %s58 = sor.u32 256, 64
    %59 = vbcast.lane.b32.xlu0 %v25, %s58
    %v60 = vpop.permute.xlu0 %59
    %s62 = sor.u32 256, 72
    %63 = vbcast.lane.b32.xlu0 %v25, %s62
    %v64 = vpop.permute.xlu0 %63
    %s66 = sor.u32 256, 80
    %67 = vbcast.lane.b32.xlu0 %v25, %s66
    %v68 = vpop.permute.xlu0 %67
    %s70 = sor.u32 256, 88
    %71 = vbcast.lane.b32.xlu0 %v25, %s70
    %v72 = vpop.permute.xlu0 %71
    %s74 = sor.u32 256, 96
    %75 = vbcast.lane.b32.xlu0 %v25, %s74
    %v76 = vpop.permute.xlu0 %75
    %s78 = sor.u32 256, 104
    %79 = vbcast.lane.b32.xlu0 %v25, %s78
    %v80 = vpop.permute.xlu0 %79
    %s82 = sor.u32 256, 112
    %83 = vbcast.lane.b32.xlu0 %v25, %s82
    %v84 = vpop.permute.xlu0 %83
    %s86 = sor.u32 256, 120
    %87 = vbcast.lane.b32.xlu0 %v25, %s86
    %v88 = vpop.permute.xlu0 %87
    %v89 = vlaneseq
    %v90 = vshrl.u32 %v89, 7
    %v91 = vsub.s32 1, %v90
    %v92 = vrot.slane %v21, %v91
    %94 = vbcast.lane.b32.xlu0 %v92, 256
    %v95 = vpop.permute.xlu0 %94
    %s97 = sor.u32 256, 8
    %98 = vbcast.lane.b32.xlu0 %v92, %s97
    %v99 = vpop.permute.xlu0 %98
    %s101 = sor.u32 256, 16
    %102 = vbcast.lane.b32.xlu0 %v92, %s101
    %v103 = vpop.permute.xlu0 %102
    %s105 = sor.u32 256, 24
    %106 = vbcast.lane.b32.xlu0 %v92, %s105
    %v107 = vpop.permute.xlu0 %106
    %s109 = sor.u32 256, 32
    %110 = vbcast.lane.b32.xlu0 %v92, %s109
    %v111 = vpop.permute.xlu0 %110
    %s113 = sor.u32 256, 40
    %114 = vbcast.lane.b32.xlu0 %v92, %s113
    %v115 = vpop.permute.xlu0 %114
    %s117 = sor.u32 256, 48
    %118 = vbcast.lane.b32.xlu0 %v92, %s117
    %v119 = vpop.permute.xlu0 %118
    %s121 = sor.u32 256, 56
    %122 = vbcast.lane.b32.xlu0 %v92, %s121
    %v123 = vpop.permute.xlu0 %122
    %s125 = sor.u32 256, 64
    %126 = vbcast.lane.b32.xlu0 %v92, %s125
    %v127 = vpop.permute.xlu0 %126
    %s129 = sor.u32 256, 72
    %130 = vbcast.lane.b32.xlu0 %v92, %s129
    %v131 = vpop.permute.xlu0 %130
    %s133 = sor.u32 256, 80
    %134 = vbcast.lane.b32.xlu0 %v92, %s133
    %v135 = vpop.permute.xlu0 %134
    %s137 = sor.u32 256, 88
    %138 = vbcast.lane.b32.xlu0 %v92, %s137
    %v139 = vpop.permute.xlu0 %138
    %s141 = sor.u32 256, 96
    %142 = vbcast.lane.b32.xlu0 %v92, %s141
    %v143 = vpop.permute.xlu0 %142
    %s145 = sor.u32 256, 104
    %146 = vbcast.lane.b32.xlu0 %v92, %s145
    %v147 = vpop.permute.xlu0 %146
    %s149 = sor.u32 256, 112
    %150 = vbcast.lane.b32.xlu0 %v92, %s149
    %v151 = vpop.permute.xlu0 %150
    %s153 = sor.u32 256, 120
    %154 = vbcast.lane.b32.xlu0 %v92, %s153
    %v155 = vpop.permute.xlu0 %154
    %v156 = vlaneseq
    %v157 = vshrl.u32 %v156, 7
    %v158 = vsub.s32 2, %v157
    %v159 = vrot.slane %v21, %v158
    %161 = vbcast.lane.b32.xlu0 %v159, 256
    %v162 = vpop.permute.xlu0 %161
    %s164 = sor.u32 256, 8
    %165 = vbcast.lane.b32.xlu0 %v159, %s164
    %v166 = vpop.permute.xlu0 %165
    %s168 = sor.u32 256, 16
    %169 = vbcast.lane.b32.xlu0 %v159, %s168
    %v170 = vpop.permute.xlu0 %169
    %s172 = sor.u32 256, 24
    %173 = vbcast.lane.b32.xlu0 %v159, %s172
    %v174 = vpop.permute.xlu0 %173
    %s176 = sor.u32 256, 32
    %177 = vbcast.lane.b32.xlu0 %v159, %s176
    %v178 = vpop.permute.xlu0 %177
    %s180 = sor.u32 256, 40
    %181 = vbcast.lane.b32.xlu0 %v159, %s180
    %v182 = vpop.permute.xlu0 %181
    %s184 = sor.u32 256, 48
    %185 = vbcast.lane.b32.xlu0 %v159, %s184
    %v186 = vpop.permute.xlu0 %185
    %s188 = sor.u32 256, 56
    %189 = vbcast.lane.b32.xlu0 %v159, %s188
    %v190 = vpop.permute.xlu0 %189
    %s192 = sor.u32 256, 64
    %193 = vbcast.lane.b32.xlu0 %v159, %s192
    %v194 = vpop.permute.xlu0 %193
    %s196 = sor.u32 256, 72
    %197 = vbcast.lane.b32.xlu0 %v159, %s196
    %v198 = vpop.permute.xlu0 %197
    %s200 = sor.u32 256, 80
    %201 = vbcast.lane.b32.xlu0 %v159, %s200
    %v202 = vpop.permute.xlu0 %201
    %s204 = sor.u32 256, 88
    %205 = vbcast.lane.b32.xlu0 %v159, %s204
    %v206 = vpop.permute.xlu0 %205
    %s208 = sor.u32 256, 96
    %209 = vbcast.lane.b32.xlu0 %v159, %s208
    %v210 = vpop.permute.xlu0 %209
    %s212 = sor.u32 256, 104
    %213 = vbcast.lane.b32.xlu0 %v159, %s212
    %v214 = vpop.permute.xlu0 %213
    %s216 = sor.u32 256, 112
    %217 = vbcast.lane.b32.xlu0 %v159, %s216
    %v218 = vpop.permute.xlu0 %217
    %s220 = sor.u32 256, 120
    %221 = vbcast.lane.b32.xlu0 %v159, %s220
    %v222 = vpop.permute.xlu0 %221
    %v223 = vlaneseq
    %v224 = vshrl.u32 %v223, 7
    %v225 = vsub.s32 3, %v224
    %v226 = vrot.slane %v21, %v225
    %228 = vbcast.lane.b32.xlu0 %v226, 256
    %v229 = vpop.permute.xlu0 %228
    %s231 = sor.u32 256, 8
    %232 = vbcast.lane.b32.xlu0 %v226, %s231
    %v233 = vpop.permute.xlu0 %232
    %s235 = sor.u32 256, 16
    %236 = vbcast.lane.b32.xlu0 %v226, %s235
    %v237 = vpop.permute.xlu0 %236
    %s239 = sor.u32 256, 24
    %240 = vbcast.lane.b32.xlu0 %v226, %s239
    %v241 = vpop.permute.xlu0 %240
    %s243 = sor.u32 256, 32
    %244 = vbcast.lane.b32.xlu0 %v226, %s243
    %v245 = vpop.permute.xlu0 %244
    %s247 = sor.u32 256, 40
    %248 = vbcast.lane.b32.xlu0 %v226, %s247
    %v249 = vpop.permute.xlu0 %248
    %s251 = sor.u32 256, 48
    %252 = vbcast.lane.b32.xlu0 %v226, %s251
    %v253 = vpop.permute.xlu0 %252
    %s255 = sor.u32 256, 56
    %256 = vbcast.lane.b32.xlu0 %v226, %s255
    %v257 = vpop.permute.xlu0 %256
    %s259 = sor.u32 256, 64
    %260 = vbcast.lane.b32.xlu0 %v226, %s259
    %v261 = vpop.permute.xlu0 %260
    %s263 = sor.u32 256, 72
    %264 = vbcast.lane.b32.xlu0 %v226, %s263
    %v265 = vpop.permute.xlu0 %264
    %s267 = sor.u32 256, 80
    %268 = vbcast.lane.b32.xlu0 %v226, %s267
    %v269 = vpop.permute.xlu0 %268
    %s271 = sor.u32 256, 88
    %272 = vbcast.lane.b32.xlu0 %v226, %s271
    %v273 = vpop.permute.xlu0 %272
    %s275 = sor.u32 256, 96
    %276 = vbcast.lane.b32.xlu0 %v226, %s275
    %v277 = vpop.permute.xlu0 %276
    %s279 = sor.u32 256, 104
    %280 = vbcast.lane.b32.xlu0 %v226, %s279
    %v281 = vpop.permute.xlu0 %280
    %s283 = sor.u32 256, 112
    %284 = vbcast.lane.b32.xlu0 %v226, %s283
    %v285 = vpop.permute.xlu0 %284
    %s287 = sor.u32 256, 120
    %288 = vbcast.lane.b32.xlu0 %v226, %s287
    %v289 = vpop.permute.xlu0 %288
    %v290 = vlaneseq
    %v291 = vshrl.u32 %v290, 7
    %v292 = vsub.s32 4, %v291
    %v293 = vrot.slane %v21, %v292
    %295 = vbcast.lane.b32.xlu0 %v293, 256
    %v296 = vpop.permute.xlu0 %295
    %s298 = sor.u32 256, 8
    %299 = vbcast.lane.b32.xlu0 %v293, %s298
    %v300 = vpop.permute.xlu0 %299
    %s302 = sor.u32 256, 16
    %303 = vbcast.lane.b32.xlu0 %v293, %s302
    %v304 = vpop.permute.xlu0 %303
    %s306 = sor.u32 256, 24
    %307 = vbcast.lane.b32.xlu0 %v293, %s306
    %v308 = vpop.permute.xlu0 %307
    %s310 = sor.u32 256, 32
    %311 = vbcast.lane.b32.xlu0 %v293, %s310
    %v312 = vpop.permute.xlu0 %311
    %s314 = sor.u32 256, 40
    %315 = vbcast.lane.b32.xlu0 %v293, %s314
    %v316 = vpop.permute.xlu0 %315
    %s318 = sor.u32 256, 48
    %319 = vbcast.lane.b32.xlu0 %v293, %s318
    %v320 = vpop.permute.xlu0 %319
    %s322 = sor.u32 256, 56
    %323 = vbcast.lane.b32.xlu0 %v293, %s322
    %v324 = vpop.permute.xlu0 %323
    %s326 = sor.u32 256, 64
    %327 = vbcast.lane.b32.xlu0 %v293, %s326
    %v328 = vpop.permute.xlu0 %327
    %s330 = sor.u32 256, 72
    %331 = vbcast.lane.b32.xlu0 %v293, %s330
    %v332 = vpop.permute.xlu0 %331
    %s334 = sor.u32 256, 80
    %335 = vbcast.lane.b32.xlu0 %v293, %s334
    %v336 = vpop.permute.xlu0 %335
    %s338 = sor.u32 256, 88
    %339 = vbcast.lane.b32.xlu0 %v293, %s338
    %v340 = vpop.permute.xlu0 %339
    %s342 = sor.u32 256, 96
    %343 = vbcast.lane.b32.xlu0 %v293, %s342
    %v344 = vpop.permute.xlu0 %343
    %s346 = sor.u32 256, 104
    %347 = vbcast.lane.b32.xlu0 %v293, %s346
    %v348 = vpop.permute.xlu0 %347
    %s350 = sor.u32 256, 112
    %351 = vbcast.lane.b32.xlu0 %v293, %s350
    %v352 = vpop.permute.xlu0 %351
    %s354 = sor.u32 256, 120
    %355 = vbcast.lane.b32.xlu0 %v293, %s354
    %v356 = vpop.permute.xlu0 %355
    %v357 = vlaneseq
    %v358 = vshrl.u32 %v357, 7
    %v359 = vsub.s32 5, %v358
    %v360 = vrot.slane %v21, %v359
    %362 = vbcast.lane.b32.xlu0 %v360, 256
    %v363 = vpop.permute.xlu0 %362
    %s365 = sor.u32 256, 8
    %366 = vbcast.lane.b32.xlu0 %v360, %s365
    %v367 = vpop.permute.xlu0 %366
    %s369 = sor.u32 256, 16
    %370 = vbcast.lane.b32.xlu0 %v360, %s369
    %v371 = vpop.permute.xlu0 %370
    %s373 = sor.u32 256, 24
    %374 = vbcast.lane.b32.xlu0 %v360, %s373
    %v375 = vpop.permute.xlu0 %374
    %s377 = sor.u32 256, 32
    %378 = vbcast.lane.b32.xlu0 %v360, %s377
    %v379 = vpop.permute.xlu0 %378
    %s381 = sor.u32 256, 40
    %382 = vbcast.lane.b32.xlu0 %v360, %s381
    %v383 = vpop.permute.xlu0 %382
    %s385 = sor.u32 256, 48
    %386 = vbcast.lane.b32.xlu0 %v360, %s385
    %v387 = vpop.permute.xlu0 %386
    %s389 = sor.u32 256, 56
    %390 = vbcast.lane.b32.xlu0 %v360, %s389
    %v391 = vpop.permute.xlu0 %390
    %s393 = sor.u32 256, 64
    %394 = vbcast.lane.b32.xlu0 %v360, %s393
    %v395 = vpop.permute.xlu0 %394
    %s397 = sor.u32 256, 72
    %398 = vbcast.lane.b32.xlu0 %v360, %s397
    %v399 = vpop.permute.xlu0 %398
    %s401 = sor.u32 256, 80
    %402 = vbcast.lane.b32.xlu0 %v360, %s401
    %v403 = vpop.permute.xlu0 %402
    %s405 = sor.u32 256, 88
    %406 = vbcast.lane.b32.xlu0 %v360, %s405
    %v407 = vpop.permute.xlu0 %406
    %s409 = sor.u32 256, 96
    %410 = vbcast.lane.b32.xlu0 %v360, %s409
    %v411 = vpop.permute.xlu0 %410
    %s413 = sor.u32 256, 104
    %414 = vbcast.lane.b32.xlu0 %v360, %s413
    %v415 = vpop.permute.xlu0 %414
    %s417 = sor.u32 256, 112
    %418 = vbcast.lane.b32.xlu0 %v360, %s417
    %v419 = vpop.permute.xlu0 %418
    %s421 = sor.u32 256, 120
    %422 = vbcast.lane.b32.xlu0 %v360, %s421
    %v423 = vpop.permute.xlu0 %422
    %v424 = vlaneseq
    %v425 = vshrl.u32 %v424, 7
    %v426 = vsub.s32 6, %v425
    %v427 = vrot.slane %v21, %v426
    %429 = vbcast.lane.b32.xlu0 %v427, 256
    %v430 = vpop.permute.xlu0 %429
    %s432 = sor.u32 256, 8
    %433 = vbcast.lane.b32.xlu0 %v427, %s432
    %v434 = vpop.permute.xlu0 %433
    %s436 = sor.u32 256, 16
    %437 = vbcast.lane.b32.xlu0 %v427, %s436
    %v438 = vpop.permute.xlu0 %437
    %s440 = sor.u32 256, 24
    %441 = vbcast.lane.b32.xlu0 %v427, %s440
    %v442 = vpop.permute.xlu0 %441
    %s444 = sor.u32 256, 32
    %445 = vbcast.lane.b32.xlu0 %v427, %s444
    %v446 = vpop.permute.xlu0 %445
    %s448 = sor.u32 256, 40
    %449 = vbcast.lane.b32.xlu0 %v427, %s448
    %v450 = vpop.permute.xlu0 %449
    %s452 = sor.u32 256, 48
    %453 = vbcast.lane.b32.xlu0 %v427, %s452
    %v454 = vpop.permute.xlu0 %453
    %s456 = sor.u32 256, 56
    %457 = vbcast.lane.b32.xlu0 %v427, %s456
    %v458 = vpop.permute.xlu0 %457
    %s460 = sor.u32 256, 64
    %461 = vbcast.lane.b32.xlu0 %v427, %s460
    %v462 = vpop.permute.xlu0 %461
    %s464 = sor.u32 256, 72
    %465 = vbcast.lane.b32.xlu0 %v427, %s464
    %v466 = vpop.permute.xlu0 %465
    %s468 = sor.u32 256, 80
    %469 = vbcast.lane.b32.xlu0 %v427, %s468
    %v470 = vpop.permute.xlu0 %469
    %s472 = sor.u32 256, 88
    %473 = vbcast.lane.b32.xlu0 %v427, %s472
    %v474 = vpop.permute.xlu0 %473
    %s476 = sor.u32 256, 96
    %477 = vbcast.lane.b32.xlu0 %v427, %s476
    %v478 = vpop.permute.xlu0 %477
    %s480 = sor.u32 256, 104
    %481 = vbcast.lane.b32.xlu0 %v427, %s480
    %v482 = vpop.permute.xlu0 %481
    %s484 = sor.u32 256, 112
    %485 = vbcast.lane.b32.xlu0 %v427, %s484
    %v486 = vpop.permute.xlu0 %485
    %s488 = sor.u32 256, 120
    %489 = vbcast.lane.b32.xlu0 %v427, %s488
    %v490 = vpop.permute.xlu0 %489
    %v491 = vlaneseq
    %v492 = vshrl.u32 %v491, 7
    %v493 = vsub.s32 7, %v492
    %v494 = vrot.slane %v21, %v493
    %496 = vbcast.lane.b32.xlu0 %v494, 256
    %v497 = vpop.permute.xlu0 %496
    %s499 = sor.u32 256, 8
    %500 = vbcast.lane.b32.xlu0 %v494, %s499
    %v501 = vpop.permute.xlu0 %500
    %s503 = sor.u32 256, 16
    %504 = vbcast.lane.b32.xlu0 %v494, %s503
    %v505 = vpop.permute.xlu0 %504
    %s507 = sor.u32 256, 24
    %508 = vbcast.lane.b32.xlu0 %v494, %s507
    %v509 = vpop.permute.xlu0 %508
    %s511 = sor.u32 256, 32
    %512 = vbcast.lane.b32.xlu0 %v494, %s511
    %v513 = vpop.permute.xlu0 %512
    %s515 = sor.u32 256, 40
    %516 = vbcast.lane.b32.xlu0 %v494, %s515
    %v517 = vpop.permute.xlu0 %516
    %s519 = sor.u32 256, 48
    %520 = vbcast.lane.b32.xlu0 %v494, %s519
    %v521 = vpop.permute.xlu0 %520
    %s523 = sor.u32 256, 56
    %524 = vbcast.lane.b32.xlu0 %v494, %s523
    %v525 = vpop.permute.xlu0 %524
    %s527 = sor.u32 256, 64
    %528 = vbcast.lane.b32.xlu0 %v494, %s527
    %v529 = vpop.permute.xlu0 %528
    %s531 = sor.u32 256, 72
    %532 = vbcast.lane.b32.xlu0 %v494, %s531
    %v533 = vpop.permute.xlu0 %532
    %s535 = sor.u32 256, 80
    %536 = vbcast.lane.b32.xlu0 %v494, %s535
    %v537 = vpop.permute.xlu0 %536
    %s539 = sor.u32 256, 88
    %540 = vbcast.lane.b32.xlu0 %v494, %s539
    %v541 = vpop.permute.xlu0 %540
    %s543 = sor.u32 256, 96
    %544 = vbcast.lane.b32.xlu0 %v494, %s543
    %v545 = vpop.permute.xlu0 %544
    %s547 = sor.u32 256, 104
    %548 = vbcast.lane.b32.xlu0 %v494, %s547
    %v549 = vpop.permute.xlu0 %548
    %s551 = sor.u32 256, 112
    %552 = vbcast.lane.b32.xlu0 %v494, %s551
    %v553 = vpop.permute.xlu0 %552
    %s555 = sor.u32 256, 120
    %556 = vbcast.lane.b32.xlu0 %v494, %s555
    %v557 = vpop.permute.xlu0 %556
    %v559 = vcombine.high %v21, %v21
    %v561 = vunpack.c.l.s4 1966171168
    %v562 = vunpack.c.0.s8 %v561
    %v563 = vlaneseq
    %v564 = vshrl.u32 %v563, 7
    %v565 = vsub.s32 %v562, %v564
    %v566 = vrot.slane %v21, %v565
    %v568 = vunpack.c.l.s4 1966171168
    %v569 = vunpack.c.0.s8 %v568
    %v570 = vlaneseq
    %v571 = vshrl.u32 %v570, 7
    %v572 = vsub.s32 %v569, %v571
    %v573 = vrot.slane %v559, %v572
    %v574 = vcombine.high %v566, %v566
    %v575 = vcombine.high %v573, %v573
    %v577 = vunpack.c.l.s4 1966171168
    %v578 = vunpack.c.0.s8 %v577
    %v579 = vlaneseq
    %v580 = vshrl.u32 %v579, 7
    %v581 = vsub.s32 %v578, %v580
    %v582 = vrot.slane %v566, %v581
    %v584 = vunpack.c.l.s4 1966171168
    %v585 = vunpack.c.0.s8 %v584
    %v586 = vlaneseq
    %v587 = vshrl.u32 %v586, 7
    %v588 = vsub.s32 %v585, %v587
    %v589 = vrot.slane %v573, %v588
    %v591 = vunpack.c.l.s4 1966171168
    %v592 = vunpack.c.0.s8 %v591
    %v593 = vlaneseq
    %v594 = vshrl.u32 %v593, 7
    %v595 = vsub.s32 %v592, %v594
    %v596 = vrot.slane %v574, %v595
    %v598 = vunpack.c.l.s4 1966171168
    %v599 = vunpack.c.0.s8 %v598
    %v600 = vlaneseq
    %v601 = vshrl.u32 %v600, 7
    %v602 = vsub.s32 %v599, %v601
    %v603 = vrot.slane %v575, %v602
    %v604 = vcombine.high %v582, %v582
    %v605 = vcombine.high %v589, %v589
    %v606 = vcombine.high %v596, %v596
    %v607 = vcombine.high %v603, %v603
    %v608 = vlaneseq
    %v609 = vshrl.u32 %v608, 7
    %v610 = vsub.s32 0, %v609
    %v611 = vrot.slane %v582, %v610
    %v612 = vlaneseq
    %v613 = vshrl.u32 %v612, 7
    %v614 = vsub.s32 0, %v613
    %v615 = vrot.slane %v596, %v614
    %v616 = vlaneseq
    %v617 = vshrl.u32 %v616, 7
    %v618 = vsub.s32 0, %v617
    %v619 = vrot.slane %v604, %v618
    %v620 = vlaneseq
    %v621 = vshrl.u32 %v620, 7
    %v622 = vsub.s32 0, %v621
    %v623 = vrot.slane %v606, %v622
    %v624 = vlaneseq
    %v625 = vshrl.u32 %v624, 7
    %v626 = vsub.s32 0, %v625
    %v627 = vrot.slane %v589, %v626
    %v628 = vlaneseq
    %v629 = vshrl.u32 %v628, 7
    %v630 = vsub.s32 0, %v629
    %v631 = vrot.slane %v603, %v630
    %v632 = vlaneseq
    %v633 = vshrl.u32 %v632, 7
    %v634 = vsub.s32 0, %v633
    %v635 = vrot.slane %v605, %v634
    %v636 = vlaneseq
    %v637 = vshrl.u32 %v636, 7
    %v638 = vsub.s32 0, %v637
    %v639 = vrot.slane %v607, %v638
    %v648 = vsub.f32 %v28, %v611
    %v649 = vsub.f32 %v95, %v615
    %v650 = vsub.f32 %v162, %v619
    %v651 = vsub.f32 %v229, %v623
    %v652 = vsub.f32 %v296, %v627
    %v653 = vsub.f32 %v363, %v631
    %v654 = vsub.f32 %v430, %v635
    %v655 = vsub.f32 %v497, %v639
    %v656 = vmax.f32 %v648, 0.0
    %v657 = vmax.f32 %v649, 0.0
    %v658 = vmax.f32 %v650, 0.0
    %v659 = vmax.f32 %v651, 0.0
    %v660 = vmax.f32 %v652, 0.0
    %v661 = vmax.f32 %v653, 0.0
    %v662 = vmax.f32 %v654, 0.0
    %v663 = vmax.f32 %v655, 0.0
    %v664 = vadd.f32 %v656, 0.0
    %v665 = vadd.f32 %v657, 0.0
    %v666 = vadd.f32 %v658, 0.0
    %v667 = vadd.f32 %v659, 0.0
    %v668 = vadd.f32 %v660, 0.0
    %v669 = vadd.f32 %v661, 0.0
    %v670 = vadd.f32 %v662, 0.0
    %v671 = vadd.f32 %v663, 0.0
    %v672 = vsub.f32 %v32, %v611
    %v673 = vsub.f32 %v99, %v615
    %v674 = vsub.f32 %v166, %v619
    %v675 = vsub.f32 %v233, %v623
    %v676 = vsub.f32 %v300, %v627
    %v677 = vsub.f32 %v367, %v631
    %v678 = vsub.f32 %v434, %v635
    %v679 = vsub.f32 %v501, %v639
    %v680 = vmax.f32 %v672, 0.0
    %v681 = vmax.f32 %v673, 0.0
    %v682 = vmax.f32 %v674, 0.0
    %v683 = vmax.f32 %v675, 0.0
    %v684 = vmax.f32 %v676, 0.0
    %v685 = vmax.f32 %v677, 0.0
    %v686 = vmax.f32 %v678, 0.0
    %v687 = vmax.f32 %v679, 0.0
    %v688 = vadd.f32 %v664, %v680
    %v689 = vadd.f32 %v665, %v681
    %v690 = vadd.f32 %v666, %v682
    %v691 = vadd.f32 %v667, %v683
    %v692 = vadd.f32 %v668, %v684
    %v693 = vadd.f32 %v669, %v685
    %v694 = vadd.f32 %v670, %v686
    %v695 = vadd.f32 %v671, %v687
    %v696 = vsub.f32 %v36, %v611
    %v697 = vsub.f32 %v103, %v615
    %v698 = vsub.f32 %v170, %v619
    %v699 = vsub.f32 %v237, %v623
    %v700 = vsub.f32 %v304, %v627
    %v701 = vsub.f32 %v371, %v631
    %v702 = vsub.f32 %v438, %v635
    %v703 = vsub.f32 %v505, %v639
    %v704 = vmax.f32 %v696, 0.0
    %v705 = vmax.f32 %v697, 0.0
    %v706 = vmax.f32 %v698, 0.0
    %v707 = vmax.f32 %v699, 0.0
    %v708 = vmax.f32 %v700, 0.0
    %v709 = vmax.f32 %v701, 0.0
    %v710 = vmax.f32 %v702, 0.0
    %v711 = vmax.f32 %v703, 0.0
    %v712 = vadd.f32 %v688, %v704
    %v713 = vadd.f32 %v689, %v705
    %v714 = vadd.f32 %v690, %v706
    %v715 = vadd.f32 %v691, %v707
    %v716 = vadd.f32 %v692, %v708
    %v717 = vadd.f32 %v693, %v709
    %v718 = vadd.f32 %v694, %v710
    %v719 = vadd.f32 %v695, %v711
    %v720 = vsub.f32 %v40, %v611
    %v721 = vsub.f32 %v107, %v615
    %v722 = vsub.f32 %v174, %v619
    %v723 = vsub.f32 %v241, %v623
    %v724 = vsub.f32 %v308, %v627
    %v725 = vsub.f32 %v375, %v631
    %v726 = vsub.f32 %v442, %v635
    %v727 = vsub.f32 %v509, %v639
    %v728 = vmax.f32 %v720, 0.0
    %v729 = vmax.f32 %v721, 0.0
    %v730 = vmax.f32 %v722, 0.0
    %v731 = vmax.f32 %v723, 0.0
    %v732 = vmax.f32 %v724, 0.0
    %v733 = vmax.f32 %v725, 0.0
    %v734 = vmax.f32 %v726, 0.0
    %v735 = vmax.f32 %v727, 0.0
    %v736 = vadd.f32 %v712, %v728
    %v737 = vadd.f32 %v713, %v729
    %v738 = vadd.f32 %v714, %v730
    %v739 = vadd.f32 %v715, %v731
    %v740 = vadd.f32 %v716, %v732
    %v741 = vadd.f32 %v717, %v733
    %v742 = vadd.f32 %v718, %v734
    %v743 = vadd.f32 %v719, %v735
    %v744 = vsub.f32 %v44, %v611
    %v745 = vsub.f32 %v111, %v615
    %v746 = vsub.f32 %v178, %v619
    %v747 = vsub.f32 %v245, %v623
    %v748 = vsub.f32 %v312, %v627
    %v749 = vsub.f32 %v379, %v631
    %v750 = vsub.f32 %v446, %v635
    %v751 = vsub.f32 %v513, %v639
    %v752 = vmax.f32 %v744, 0.0
    %v753 = vmax.f32 %v745, 0.0
    %v754 = vmax.f32 %v746, 0.0
    %v755 = vmax.f32 %v747, 0.0
    %v756 = vmax.f32 %v748, 0.0
    %v757 = vmax.f32 %v749, 0.0
    %v758 = vmax.f32 %v750, 0.0
    %v759 = vmax.f32 %v751, 0.0
    %v760 = vadd.f32 %v736, %v752
    %v761 = vadd.f32 %v737, %v753
    %v762 = vadd.f32 %v738, %v754
    %v763 = vadd.f32 %v739, %v755
    %v764 = vadd.f32 %v740, %v756
    %v765 = vadd.f32 %v741, %v757
    %v766 = vadd.f32 %v742, %v758
    %v767 = vadd.f32 %v743, %v759
    %v768 = vsub.f32 %v48, %v611
    %v769 = vsub.f32 %v115, %v615
    %v770 = vsub.f32 %v182, %v619
    %v771 = vsub.f32 %v249, %v623
    %v772 = vsub.f32 %v316, %v627
    %v773 = vsub.f32 %v383, %v631
    %v774 = vsub.f32 %v450, %v635
    %v775 = vsub.f32 %v517, %v639
    %v776 = vmax.f32 %v768, 0.0
    %v777 = vmax.f32 %v769, 0.0
    %v778 = vmax.f32 %v770, 0.0
    %v779 = vmax.f32 %v771, 0.0
    %v780 = vmax.f32 %v772, 0.0
    %v781 = vmax.f32 %v773, 0.0
    %v782 = vmax.f32 %v774, 0.0
    %v783 = vmax.f32 %v775, 0.0
    %v784 = vadd.f32 %v760, %v776
    %v785 = vadd.f32 %v761, %v777
    %v786 = vadd.f32 %v762, %v778
    %v787 = vadd.f32 %v763, %v779
    %v788 = vadd.f32 %v764, %v780
    %v789 = vadd.f32 %v765, %v781
    %v790 = vadd.f32 %v766, %v782
    %v791 = vadd.f32 %v767, %v783
    %v792 = vsub.f32 %v52, %v611
    %v793 = vsub.f32 %v119, %v615
    %v794 = vsub.f32 %v186, %v619
    %v795 = vsub.f32 %v253, %v623
    %v796 = vsub.f32 %v320, %v627
    %v797 = vsub.f32 %v387, %v631
    %v798 = vsub.f32 %v454, %v635
    %v799 = vsub.f32 %v521, %v639
    %v800 = vmax.f32 %v792, 0.0
    %v801 = vmax.f32 %v793, 0.0
    %v802 = vmax.f32 %v794, 0.0
    %v803 = vmax.f32 %v795, 0.0
    %v804 = vmax.f32 %v796, 0.0
    %v805 = vmax.f32 %v797, 0.0
    %v806 = vmax.f32 %v798, 0.0
    %v807 = vmax.f32 %v799, 0.0
    %v808 = vadd.f32 %v784, %v800
    %v809 = vadd.f32 %v785, %v801
    %v810 = vadd.f32 %v786, %v802
    %v811 = vadd.f32 %v787, %v803
    %v812 = vadd.f32 %v788, %v804
    %v813 = vadd.f32 %v789, %v805
    %v814 = vadd.f32 %v790, %v806
    %v815 = vadd.f32 %v791, %v807
    %v816 = vsub.f32 %v56, %v611
    %v817 = vsub.f32 %v123, %v615
    %v818 = vsub.f32 %v190, %v619
    %v819 = vsub.f32 %v257, %v623
    %v820 = vsub.f32 %v324, %v627
    %v821 = vsub.f32 %v391, %v631
    %v822 = vsub.f32 %v458, %v635
    %v823 = vsub.f32 %v525, %v639
    %v824 = vmax.f32 %v816, 0.0
    %v825 = vmax.f32 %v817, 0.0
    %v826 = vmax.f32 %v818, 0.0
    %v827 = vmax.f32 %v819, 0.0
    %v828 = vmax.f32 %v820, 0.0
    %v829 = vmax.f32 %v821, 0.0
    %v830 = vmax.f32 %v822, 0.0
    %v831 = vmax.f32 %v823, 0.0
    %v832 = vadd.f32 %v808, %v824
    %v833 = vadd.f32 %v809, %v825
    %v834 = vadd.f32 %v810, %v826
    %v835 = vadd.f32 %v811, %v827
    %v836 = vadd.f32 %v812, %v828
    %v837 = vadd.f32 %v813, %v829
    %v838 = vadd.f32 %v814, %v830
    %v839 = vadd.f32 %v815, %v831
    %v840 = vsub.f32 %v60, %v611
    %v841 = vsub.f32 %v127, %v615
    %v842 = vsub.f32 %v194, %v619
    %v843 = vsub.f32 %v261, %v623
    %v844 = vsub.f32 %v328, %v627
    %v845 = vsub.f32 %v395, %v631
    %v846 = vsub.f32 %v462, %v635
    %v847 = vsub.f32 %v529, %v639
    %v848 = vmax.f32 %v840, 0.0
    %v849 = vmax.f32 %v841, 0.0
    %v850 = vmax.f32 %v842, 0.0
    %v851 = vmax.f32 %v843, 0.0
    %v852 = vmax.f32 %v844, 0.0
    %v853 = vmax.f32 %v845, 0.0
    %v854 = vmax.f32 %v846, 0.0
    %v855 = vmax.f32 %v847, 0.0
    %v856 = vadd.f32 %v832, %v848
    %v857 = vadd.f32 %v833, %v849
    %v858 = vadd.f32 %v834, %v850
    %v859 = vadd.f32 %v835, %v851
    %v860 = vadd.f32 %v836, %v852
    %v861 = vadd.f32 %v837, %v853
    %v862 = vadd.f32 %v838, %v854
    %v863 = vadd.f32 %v839, %v855
    %v864 = vsub.f32 %v64, %v611
    %v865 = vsub.f32 %v131, %v615
    %v866 = vsub.f32 %v198, %v619
    %v867 = vsub.f32 %v265, %v623
    %v868 = vsub.f32 %v332, %v627
    %v869 = vsub.f32 %v399, %v631
    %v870 = vsub.f32 %v466, %v635
    %v871 = vsub.f32 %v533, %v639
    %v872 = vmax.f32 %v864, 0.0
    %v873 = vmax.f32 %v865, 0.0
    %v874 = vmax.f32 %v866, 0.0
    %v875 = vmax.f32 %v867, 0.0
    %v876 = vmax.f32 %v868, 0.0
    %v877 = vmax.f32 %v869, 0.0
    %v878 = vmax.f32 %v870, 0.0
    %v879 = vmax.f32 %v871, 0.0
    %v880 = vadd.f32 %v856, %v872
    %v881 = vadd.f32 %v857, %v873
    %v882 = vadd.f32 %v858, %v874
    %v883 = vadd.f32 %v859, %v875
    %v884 = vadd.f32 %v860, %v876
    %v885 = vadd.f32 %v861, %v877
    %v886 = vadd.f32 %v862, %v878
    %v887 = vadd.f32 %v863, %v879
    %v888 = vsub.f32 %v68, %v611
    %v889 = vsub.f32 %v135, %v615
    %v890 = vsub.f32 %v202, %v619
    %v891 = vsub.f32 %v269, %v623
    %v892 = vsub.f32 %v336, %v627
    %v893 = vsub.f32 %v403, %v631
    %v894 = vsub.f32 %v470, %v635
    %v895 = vsub.f32 %v537, %v639
    %v896 = vmax.f32 %v888, 0.0
    %v897 = vmax.f32 %v889, 0.0
    %v898 = vmax.f32 %v890, 0.0
    %v899 = vmax.f32 %v891, 0.0
    %v900 = vmax.f32 %v892, 0.0
    %v901 = vmax.f32 %v893, 0.0
    %v902 = vmax.f32 %v894, 0.0
    %v903 = vmax.f32 %v895, 0.0
    %v904 = vadd.f32 %v880, %v896
    %v905 = vadd.f32 %v881, %v897
    %v906 = vadd.f32 %v882, %v898
    %v907 = vadd.f32 %v883, %v899
    %v908 = vadd.f32 %v884, %v900
    %v909 = vadd.f32 %v885, %v901
    %v910 = vadd.f32 %v886, %v902
    %v911 = vadd.f32 %v887, %v903
    %v912 = vsub.f32 %v72, %v611
    %v913 = vsub.f32 %v139, %v615
    %v914 = vsub.f32 %v206, %v619
    %v915 = vsub.f32 %v273, %v623
    %v916 = vsub.f32 %v340, %v627
    %v917 = vsub.f32 %v407, %v631
    %v918 = vsub.f32 %v474, %v635
    %v919 = vsub.f32 %v541, %v639
    %v920 = vmax.f32 %v912, 0.0
    %v921 = vmax.f32 %v913, 0.0
    %v922 = vmax.f32 %v914, 0.0
    %v923 = vmax.f32 %v915, 0.0
    %v924 = vmax.f32 %v916, 0.0
    %v925 = vmax.f32 %v917, 0.0
    %v926 = vmax.f32 %v918, 0.0
    %v927 = vmax.f32 %v919, 0.0
    %v928 = vadd.f32 %v904, %v920
    %v929 = vadd.f32 %v905, %v921
    %v930 = vadd.f32 %v906, %v922
    %v931 = vadd.f32 %v907, %v923
    %v932 = vadd.f32 %v908, %v924
    %v933 = vadd.f32 %v909, %v925
    %v934 = vadd.f32 %v910, %v926
    %v935 = vadd.f32 %v911, %v927
    %v936 = vsub.f32 %v76, %v611
    %v937 = vsub.f32 %v143, %v615
    %v938 = vsub.f32 %v210, %v619
    %v939 = vsub.f32 %v277, %v623
    %v940 = vsub.f32 %v344, %v627
    %v941 = vsub.f32 %v411, %v631
    %v942 = vsub.f32 %v478, %v635
    %v943 = vsub.f32 %v545, %v639
    %v944 = vmax.f32 %v936, 0.0
    %v945 = vmax.f32 %v937, 0.0
    %v946 = vmax.f32 %v938, 0.0
    %v947 = vmax.f32 %v939, 0.0
    %v948 = vmax.f32 %v940, 0.0
    %v949 = vmax.f32 %v941, 0.0
    %v950 = vmax.f32 %v942, 0.0
    %v951 = vmax.f32 %v943, 0.0
    %v952 = vadd.f32 %v928, %v944
    %v953 = vadd.f32 %v929, %v945
    %v954 = vadd.f32 %v930, %v946
    %v955 = vadd.f32 %v931, %v947
    %v956 = vadd.f32 %v932, %v948
    %v957 = vadd.f32 %v933, %v949
    %v958 = vadd.f32 %v934, %v950
    %v959 = vadd.f32 %v935, %v951
    %v960 = vsub.f32 %v80, %v611
    %v961 = vsub.f32 %v147, %v615
    %v962 = vsub.f32 %v214, %v619
    %v963 = vsub.f32 %v281, %v623
    %v964 = vsub.f32 %v348, %v627
    %v965 = vsub.f32 %v415, %v631
    %v966 = vsub.f32 %v482, %v635
    %v967 = vsub.f32 %v549, %v639
    %v968 = vmax.f32 %v960, 0.0
    %v969 = vmax.f32 %v961, 0.0
    %v970 = vmax.f32 %v962, 0.0
    %v971 = vmax.f32 %v963, 0.0
    %v972 = vmax.f32 %v964, 0.0
    %v973 = vmax.f32 %v965, 0.0
    %v974 = vmax.f32 %v966, 0.0
    %v975 = vmax.f32 %v967, 0.0
    %v976 = vadd.f32 %v952, %v968
    %v977 = vadd.f32 %v953, %v969
    %v978 = vadd.f32 %v954, %v970
    %v979 = vadd.f32 %v955, %v971
    %v980 = vadd.f32 %v956, %v972
    %v981 = vadd.f32 %v957, %v973
    %v982 = vadd.f32 %v958, %v974
    %v983 = vadd.f32 %v959, %v975
    %v984 = vsub.f32 %v84, %v611
    %v985 = vsub.f32 %v151, %v615
    %v986 = vsub.f32 %v218, %v619
    %v987 = vsub.f32 %v285, %v623
    %v988 = vsub.f32 %v352, %v627
    %v989 = vsub.f32 %v419, %v631
    %v990 = vsub.f32 %v486, %v635
    %v991 = vsub.f32 %v553, %v639
    %v992 = vmax.f32 %v984, 0.0
    %v993 = vmax.f32 %v985, 0.0
    %v994 = vmax.f32 %v986, 0.0
    %v995 = vmax.f32 %v987, 0.0
    %v996 = vmax.f32 %v988, 0.0
    %v997 = vmax.f32 %v989, 0.0
    %v998 = vmax.f32 %v990, 0.0
    %v999 = vmax.f32 %v991, 0.0
    %v1000 = vadd.f32 %v976, %v992
    %v1001 = vadd.f32 %v977, %v993
    %v1002 = vadd.f32 %v978, %v994
    %v1003 = vadd.f32 %v979, %v995
    %v1004 = vadd.f32 %v980, %v996
    %v1005 = vadd.f32 %v981, %v997
    %v1006 = vadd.f32 %v982, %v998
    %v1007 = vadd.f32 %v983, %v999
    %v1008 = vsub.f32 %v88, %v611
    %v1009 = vsub.f32 %v155, %v615
    %v1010 = vsub.f32 %v222, %v619
    %v1011 = vsub.f32 %v289, %v623
    %v1012 = vsub.f32 %v356, %v627
    %v1013 = vsub.f32 %v423, %v631
    %v1014 = vsub.f32 %v490, %v635
    %v1015 = vsub.f32 %v557, %v639
    %v1016 = vmax.f32 %v1008, 0.0
    %v1017 = vmax.f32 %v1009, 0.0
    %v1018 = vmax.f32 %v1010, 0.0
    %v1019 = vmax.f32 %v1011, 0.0
    %v1020 = vmax.f32 %v1012, 0.0
    %v1021 = vmax.f32 %v1013, 0.0
    %v1022 = vmax.f32 %v1014, 0.0
    %v1023 = vmax.f32 %v1015, 0.0
    %v1024 = vadd.f32 %v1000, %v1016
    %v1025 = vadd.f32 %v1001, %v1017
    %v1026 = vadd.f32 %v1002, %v1018
    %v1027 = vadd.f32 %v1003, %v1019
    %v1028 = vadd.f32 %v1004, %v1020
    %v1029 = vadd.f32 %v1005, %v1021
    %v1030 = vadd.f32 %v1006, %v1022
    %v1031 = vadd.f32 %v1007, %v1023
    %v1032 = vrot.slane %v1024, 4
    %v1033 = vadd.f32 %v1024, %v1032
    %v1034 = vrot.slane %v1033, 2
    %v1035 = vadd.f32 %v1033, %v1034
    %v1036 = vrot.slane %v1035, 1
    %v1037 = vadd.f32 %v1035, %v1036
    %v1038 = vrot.slane %v1025, 4
    %v1039 = vadd.f32 %v1025, %v1038
    %v1040 = vrot.slane %v1039, 2
    %v1041 = vadd.f32 %v1039, %v1040
    %v1042 = vrot.slane %v1041, 1
    %v1043 = vadd.f32 %v1041, %v1042
    %v1044 = vrot.slane %v1026, 4
    %v1045 = vadd.f32 %v1026, %v1044
    %v1046 = vrot.slane %v1045, 2
    %v1047 = vadd.f32 %v1045, %v1046
    %v1048 = vrot.slane %v1047, 1
    %v1049 = vadd.f32 %v1047, %v1048
    %v1050 = vrot.slane %v1027, 4
    %v1051 = vadd.f32 %v1027, %v1050
    %v1052 = vrot.slane %v1051, 2
    %v1053 = vadd.f32 %v1051, %v1052
    %v1054 = vrot.slane %v1053, 1
    %v1055 = vadd.f32 %v1053, %v1054
    %v1056 = vrot.slane %v1028, 4
    %v1057 = vadd.f32 %v1028, %v1056
    %v1058 = vrot.slane %v1057, 2
    %v1059 = vadd.f32 %v1057, %v1058
    %v1060 = vrot.slane %v1059, 1
    %v1061 = vadd.f32 %v1059, %v1060
    %v1062 = vrot.slane %v1029, 4
    %v1063 = vadd.f32 %v1029, %v1062
    %v1064 = vrot.slane %v1063, 2
    %v1065 = vadd.f32 %v1063, %v1064
    %v1066 = vrot.slane %v1065, 1
    %v1067 = vadd.f32 %v1065, %v1066
    %v1068 = vrot.slane %v1030, 4
    %v1069 = vadd.f32 %v1030, %v1068
    %v1070 = vrot.slane %v1069, 2
    %v1071 = vadd.f32 %v1069, %v1070
    %v1072 = vrot.slane %v1071, 1
    %v1073 = vadd.f32 %v1071, %v1072
    %v1074 = vrot.slane %v1031, 4
    %v1075 = vadd.f32 %v1031, %v1074
    %v1076 = vrot.slane %v1075, 2
    %v1077 = vadd.f32 %v1075, %v1076
    %v1078 = vrot.slane %v1077, 1
    %v1079 = vadd.f32 %v1077, %v1078
    %vm1080 = vcmp.lt.f32.partialorder %v1037, 1.0
    %vm1081 = vcmp.lt.f32.partialorder %v1043, 1.0
    %vm1082 = vcmp.lt.f32.partialorder %v1049, 1.0
    %vm1083 = vcmp.lt.f32.partialorder %v1055, 1.0
    %vm1084 = vcmp.lt.f32.partialorder %v1061, 1.0
    %vm1085 = vcmp.lt.f32.partialorder %v1067, 1.0
    %vm1086 = vcmp.lt.f32.partialorder %v1073, 1.0
    %vm1087 = vcmp.lt.f32.partialorder %v1079, 1.0
    %v1088 = vsel %vm1080, 1, 0
    %v1089 = vsel %vm1081, 1, 0
    %v1090 = vsel %vm1082, 1, 0
    %v1091 = vsel %vm1083, 1, 0
    %v1092 = vsel %vm1084, 1, 0
    %v1093 = vsel %vm1085, 1, 0
    %v1094 = vsel %vm1086, 1, 0
    %v1095 = vsel %vm1087, 1, 0
    %v1096 = vcvt.s32.f32 %v1088
    %v1097 = vcvt.s32.f32 %v1089
    %v1098 = vcvt.s32.f32 %v1090
    %v1099 = vcvt.s32.f32 %v1091
    %v1100 = vcvt.s32.f32 %v1092
    %v1101 = vcvt.s32.f32 %v1093
    %v1102 = vcvt.s32.f32 %v1094
    %v1103 = vcvt.s32.f32 %v1095
    %vm1112 = vcmask 1041409
    %v1113 = vsel %vm1112, %v1097, %v1096
    %vm1114 = vcmask 1042434
    %v1115 = vsel %vm1114, %v1098, %v1113
    %vm1116 = vcmask 1043459
    %v1117 = vsel %vm1116, %v1099, %v1115
    %vm1118 = vcmask 1044484
    %v1119 = vsel %vm1118, %v1100, %v1117
    %vm1120 = vcmask 1045509
    %v1121 = vsel %vm1120, %v1101, %v1119
    %vm1122 = vcmask 1046534
    %v1123 = vsel %vm1122, %v1102, %v1121
    %vm1124 = vcmask 1047559
    %v1125 = vsel %vm1124, %v1103, %v1123
    %1127 = vadd.xlane.f32.xlu0 %v1125
    %v1128 = vpop.xlane.xlu0 %1127
    %v1129 = vadd.f32 %v1128, 0.0
    %v1130 = vrot.slane %v21, 1
    %v1131 = vrot.slane %v21, 2
    %v1132 = vrot.slane %v21, 3
    %v1133 = vrot.slane %v21, 4
    %v1134 = vrot.slane %v21, 5
    %v1135 = vrot.slane %v21, 6
    %v1136 = vrot.slane %v21, 7
    %v1145 = vmul.f32 %v1096, %v21
    %v1146 = vmul.f32 %v1097, %v1130
    %v1147 = vmul.f32 %v1098, %v1131
    %v1148 = vmul.f32 %v1099, %v1132
    %v1149 = vmul.f32 %v1100, %v1133
    %v1150 = vmul.f32 %v1101, %v1134
    %v1151 = vmul.f32 %v1102, %v1135
    %v1152 = vmul.f32 %v1103, %v1136
    %v1161 = vrot.slane %v1146, 7
    %v1162 = vsel %vm1112, %v1161, %v1145
    %v1163 = vrot.slane %v1147, 6
    %v1164 = vsel %vm1114, %v1163, %v1162
    %v1165 = vrot.slane %v1148, 5
    %v1166 = vsel %vm1116, %v1165, %v1164
    %v1167 = vrot.slane %v1149, 4
    %v1168 = vsel %vm1118, %v1167, %v1166
    %v1169 = vrot.slane %v1150, 3
    %v1170 = vsel %vm1120, %v1169, %v1168
    %v1171 = vrot.slane %v1151, 2
    %v1172 = vsel %vm1122, %v1171, %v1170
    %v1173 = vrot.slane %v1152, 1
    %v1174 = vsel %vm1124, %v1173, %v1172
    %1176 = vadd.xlane.f32.xlu0 %v1174
    %v1177 = vpop.xlane.xlu0 %1176
    %v1178 = vadd.f32 %v1177, 0.0
    %v1179 = vmax.f32 %v1129, 1.0
    %v1180 = vsub.f32 %v1178, 1.0
    %v1181 = vrcp.pop %v1179
    %v1182 = vmul.f32 %v1180, %v1181
    %v1183 = vsub.f32 %v21, %v1182
    %v1184 = vmax.f32 %v1183, 0.0
    %1185 = vst [vmem:[#allocation5] sm:$0xff] %v1184
    // Predicated region
    $region10: #{tpu_custom_call.1} parent=1 // pred_check
      _
    $region11: #{tpu_custom_call.1} parent=1 // pred_check_branch
      %1187 = sbr.rel (0) target = $region13
    $region12: #{tpu_custom_call.1} parent=1 // pred_region
      %s1189 = ssub.s32 128, 128
      %1190 = vsyncadd [#allocation4], %s1189
      %s1192 = sshll.u32 [#allocation5], 4
      %s1193 = int_to_ptr.vmem [resolvable:$true] %s1192
      %1195 = dma.vmem_to_hbm [thread:$0]  %s1193, 128, %s1, [#allocation4]
    $region13: #{tpu_custom_call.1} parent=1 // pred_fallthru
      _
    // Predicated region
    $region14: #{tpu_custom_call.1} parent=1 // pred_check
      _
    $region15: #{tpu_custom_call.1} parent=1 // pred_check_branch
      %1197 = sbr.rel (0) target = $region17
    $region16: #{tpu_custom_call.1} parent=1 // pred_region
      %1198 = dma.done [#allocation4], 128
    $region17: #{tpu_custom_call.1} parent=1 // pred_fallthru
      _
    %1199 = vsyncpa [#allocation3], 1
    %1200 = vsyncpa [#allocation4], 1

</llo_original>
